<compile_context>
chip_gen: v7x
topology: tpu7x:2x2x1
jax: 0.10.0
libtpu: 0.0.40
codegen_flags: <defaults>
</compile_context>

<pallas_src>
import jax
import jax.numpy as jnp
from jax.experimental import pallas as pl
from jax.experimental.pallas import tpu as pltpu


def net2_kernel(cw_ref, cb_ref, x_ref, w_ref, b_ref, o_ref):
    # cw_ref, cb_ref : (1,) f32 SMEM      -- 1x1 conv weight / bias (scalar affine)
    # x_ref          : (TR, 128) f32 VMEM -- 8 samples x 16 features per row (lane-dense)
    # w_ref          : (128, 16) f32 VMEM -- block-diagonal Linear weight, grid-resident
    # b_ref          : (1, 16)  f32 VMEM  -- Linear bias tiled x8, grid-resident
    # o_ref          : (TR, 16) f32 VMEM  -- 8 samples x 2 outputs per row
    cw = cw_ref[0]
    cb = cb_ref[0]
    # Conv2d(1, 1, kernel_size=1) == elementwise scalar affine, then ReLU.
    h = jnp.maximum(x_ref[...] * cw + cb, 0.0)                       # (TR, 128)
    # Linear(16, 2) for all 8 packed samples at once via the block-diagonal
    # weight: (TR,128) @ (128,16) -> (TR,16), f32 MXU accumulate.
    o_ref[...] = (
        jnp.dot(h, w_ref[...], preferred_element_type=jnp.float32) + b_ref[...]
    )


def net2_forward(x, conv_w, conv_b, lin_w, lin_b, *, tile_rows=16384):
    """x: (B, 1, H, W) with H*W == 16; returns (B, 2) float32.

    tile_rows = packed rows per grid step (1 row == 8 batch samples); must be a
    multiple of 8. Default 16384 rows == 131072 samples == 8 MiB per x tile.
    """
    assert tile_rows % 8 == 0
    B = x.shape[0]
    x2d = x.reshape(B, -1).astype(jnp.float32)        # == x.view(B, -1) -> (B, 16)
    assert x2d.shape[1] == 16, "Net2 expects 16 flattened features (e.g. 1x4x4)"

    # Pad batch to a multiple of 8 only (tiny; usually a no-op), then zero-copy
    # reinterpret (Bp,16) -> (Bp/8,128): natural layout, no transpose pass.
    Bp = ((B + 7) // 8) * 8
    if Bp != B:
        x2d = jnp.pad(x2d, ((0, Bp - B), (0, 0)))
    rows = Bp // 8
    xr = x2d.reshape(rows, 128)

    # Block-diagonal weight: W_big[16*s+f, 2*s+c] = lin_w[c, f], s in 0..7.
    w_big = jnp.kron(jnp.eye(8, dtype=jnp.float32), lin_w.astype(jnp.float32).T)  # (128,16)
    b_big = jnp.tile(lin_b.astype(jnp.float32), 8).reshape(1, 16)                 # (1,16)

    # Single full-array tile when it fits; otherwise tile the packed-row axis.
    tr = rows if rows <= tile_rows else tile_rows
    grid = (pl.cdiv(rows, tr),)   # ragged last block handled by Pallas edge masking

    out = pl.pallas_call(
        net2_kernel,
        out_shape=jax.ShapeDtypeStruct((rows, 16), jnp.float32),
        grid=grid,
        in_specs=[
            pl.BlockSpec(memory_space=pltpu.MemorySpace.SMEM),   # conv weight (1,)
            pl.BlockSpec(memory_space=pltpu.MemorySpace.SMEM),   # conv bias   (1,)
            pl.BlockSpec((tr, 128), lambda i: (i, 0)),           # x tile (lane-dense)
            pl.BlockSpec((128, 16), lambda i: (0, 0)),           # W_big, resident
            pl.BlockSpec((1, 16), lambda i: (0, 0)),             # bias, resident
        ],
        out_specs=pl.BlockSpec((tr, 16), lambda i: (i, 0)),
        compiler_params=pltpu.CompilerParams(
            dimension_semantics=("parallel",),       # shard batch tiles on v7x's 2 TCs
            vmem_limit_bytes=32 * 1024 * 1024,       # ~18 MiB double-buffered @ tr=16384
        ),
    )(
        conv_w.reshape(1).astype(jnp.float32),
        conv_b.reshape(1).astype(jnp.float32),
        xr,
        w_big,
        b_big,
    )
    # (rows,16) -> (Bp,2) is a free row-major reshape; slice off the <8-row pad.
    return out.reshape(Bp, 2)[:B]


if __name__ == "__main__":
    key = jax.random.PRNGKey(0)
    k1, k2, k3, k4, k5, k6, k7 = jax.random.split(key, 7)

    # Parameters with the same shapes as the PyTorch module.
    conv_w = jax.random.normal(k2, (1, 1, 1, 1), dtype=jnp.float32)   # Conv2d(1,1,1) weight
    conv_b = jax.random.normal(k3, (1,), dtype=jnp.float32)           # Conv2d bias
    lin_w = 0.25 * jax.random.normal(k4, (2, 16), dtype=jnp.float32)  # Linear(16, 2) weight
    lin_b = jax.random.normal(k5, (2,), dtype=jnp.float32)            # Linear bias

    def reference(xin):
        h = jnp.maximum(
            xin.reshape(xin.shape[0], -1) * conv_w.reshape(()) + conv_b[0], 0.0
        )
        return h @ lin_w.T + lin_b

    # Case 1: the module's natural tiny shape -- (B=2, 1, 4, 4) -> 16 features.
    x_small = jax.random.normal(k1, (2, 1, 4, 4), dtype=jnp.float32)
    out_small = jax.block_until_ready(
        net2_forward(x_small, conv_w, conv_b, lin_w, lin_b)
    )
    assert out_small.shape == (2, 2)
    assert jnp.allclose(out_small, reference(x_small), atol=1e-5, rtol=1e-5)

    # Case 2: batch not a multiple of 8 (exercises the tiny multiple-of-8 pad).
    x_odd = jax.random.normal(k7, (37, 1, 4, 4), dtype=jnp.float32)
    out_odd = jax.block_until_ready(
        net2_forward(x_odd, conv_w, conv_b, lin_w, lin_b)
    )
    assert out_odd.shape == (37, 2)
    assert jnp.allclose(out_odd, reference(x_odd), atol=1e-5, rtol=1e-5)

    # Case 3: larger batch with a small tile to exercise the multi-tile grid and
    # the ragged (implicitly masked) last block: rows=2500, tile=1024 -> grid=3.
    x_big = jax.random.normal(k6, (20000, 1, 4, 4), dtype=jnp.float32)
    out_big = jax.block_until_ready(
        net2_forward(x_big, conv_w, conv_b, lin_w, lin_b, tile_rows=1024)
    )
    assert out_big.shape == (20000, 2)
    assert jnp.allclose(out_big, reference(x_big), atol=1e-4, rtol=1e-4)

    print("KERNEL_OK")
</pallas_src>

<mosaic_0001>
module attributes {stable_mosaic.version = 11 : i64} {
  func.func @net2_kernel(%arg0: i32, %arg1: memref<1xf32, #tpu.memory_space<smem>>, %arg2: memref<1xf32, #tpu.memory_space<smem>>, %arg3: memref<1x128xf32, #tpu.memory_space<vmem>>, %arg4: memref<128x16xf32, #tpu.memory_space<vmem>>, %arg5: memref<1x16xf32, #tpu.memory_space<vmem>>, %arg6: memref<1x16xf32, #tpu.memory_space<vmem>>) attributes {dimension_semantics = [#tpu.dimension_semantics<parallel>], iteration_bounds = array<i64: 1>, scalar_prefetch = 0 : i64, scratch_operands = 0 : i64, tpu.core_type = #tpu.core_type<tc>, window_params = [{transform_indices = @transform_0, window_bounds = array<i64: 1>}, {transform_indices = @transform_1, window_bounds = array<i64: 1>}, {transform_indices = @transform_2, window_bounds = array<i64: 1, 128>}, {pipeline_mode = #tpu.pipeline_mode<synchronous>, transform_indices = @transform_3, window_bounds = array<i64: 128, 16>}, {pipeline_mode = #tpu.pipeline_mode<synchronous>, transform_indices = @transform_4, window_bounds = array<i64: 1, 16>}, {transform_indices = @transform_5, window_bounds = array<i64: 1, 16>}]} {
    %c0 = arith.constant 0 : index
    %0 = memref.load %arg1[%c0] : memref<1xf32, #tpu.memory_space<smem>>
    %c0_0 = arith.constant 0 : index
    %1 = memref.load %arg2[%c0_0] : memref<1xf32, #tpu.memory_space<smem>>
    %c0_1 = arith.constant 0 : index
    %c0_2 = arith.constant 0 : index
    %2 = vector.load %arg3[%c0_1, %c0_2] : memref<1x128xf32, #tpu.memory_space<vmem>>, vector<1x128xf32>
    %3 = vector.broadcast %0 : f32 to vector<1x128xf32>
    %4 = arith.mulf %2, %3 : vector<1x128xf32>
    %5 = vector.broadcast %1 : f32 to vector<1x128xf32>
    %6 = arith.addf %4, %5 : vector<1x128xf32>
    %cst = arith.constant 0.000000e+00 : f32
    %7 = vector.broadcast %cst : f32 to vector<1x128xf32>
    %8 = arith.maximumf %6, %7 : vector<1x128xf32>
    %c0_3 = arith.constant 0 : index
    %c0_4 = arith.constant 0 : index
    %9 = vector.load %arg4[%c0_3, %c0_4] : memref<128x16xf32, #tpu.memory_space<vmem>>, vector<128x16xf32>
    %cst_5 = arith.constant dense<0.000000e+00> : vector<1x16xf32>
    %10 = tpu.matmul %8, %9, %cst_5 {dimension_numbers = #tpu.dot_dimension_numbers<[1], [0], [0], [1], [0, 0, 1, 1], [], []>} : vector<1x128xf32>, vector<128x16xf32>, vector<1x16xf32> -> vector<1x16xf32>
    %c0_6 = arith.constant 0 : index
    %c0_7 = arith.constant 0 : index
    %11 = vector.load %arg5[%c0_6, %c0_7] : memref<1x16xf32, #tpu.memory_space<vmem>>, vector<1x16xf32>
    %12 = arith.addf %10, %11 : vector<1x16xf32>
    %c0_8 = arith.constant 0 : index
    %c0_9 = arith.constant 0 : index
    %13 = vector.load %arg6[%c0_8, %c0_9] : memref<1x16xf32, #tpu.memory_space<vmem>>, vector<1x16xf32>
    tpu.vector_store %arg6[%c0_8, %c0_9], %12 {strides = array<i32>} : memref<1x16xf32, #tpu.memory_space<vmem>>, vector<1x16xf32>,
    return
  }
  func.func @transform_0(%arg0: i32) -> i32 {
    %c0_i32 = arith.constant 0 : i32
    %c0_i32_0 = arith.constant 0 : i32
    return %c0_i32 : i32
  }
  func.func @transform_1(%arg0: i32) -> i32 {
    %c0_i32 = arith.constant 0 : i32
    %c0_i32_0 = arith.constant 0 : i32
    return %c0_i32 : i32
  }
  func.func @transform_2(%arg0: i32) -> (i32, i32) {
    %c0_i32 = arith.constant 0 : i32
    %c0_i32_0 = arith.constant 0 : i32
    return %arg0, %c0_i32 : i32, i32
  }
  func.func @transform_3(%arg0: i32) -> (i32, i32) {
    %c0_i32 = arith.constant 0 : i32
    %c0_i32_0 = arith.constant 0 : i32
    %c0_i32_1 = arith.constant 0 : i32
    return %c0_i32, %c0_i32_0 : i32, i32
  }
  func.func @transform_4(%arg0: i32) -> (i32, i32) {
    %c0_i32 = arith.constant 0 : i32
    %c0_i32_0 = arith.constant 0 : i32
    %c0_i32_1 = arith.constant 0 : i32
    return %c0_i32, %c0_i32_0 : i32, i32
  }
  func.func @transform_5(%arg0: i32) -> (i32, i32) {
    %c0_i32 = arith.constant 0 : i32
    %c0_i32_0 = arith.constant 0 : i32
    return %arg0, %c0_i32 : i32, i32
  }
}

</mosaic_0001>

<llo_original>
// kernel: tpu_custom_call.1
$region0: #{tpu_custom_call.1}
  #allocation0 [shape = 'u32[]', space=smem, size = 0x4, offset = 0x4, fixed_abs, tag = 'smem constant byte address 0x4 - core index']
  #allocation1 [shape = 'u32[144,128]{1,0:T(1,128)}', space=vmem, size = 0x12000, scoped, tag = 'internal scratch']
  #allocation2 [shape = 'f32[1]{0:T(128)S(6)}', space=smem, size = 0x200, scoped, tag = 'scoped memory for tpu_custom_call.1']
  #allocation3 [shape = 'f32[1]{0:T(128)S(6)}', space=smem, size = 0x200, scoped, tag = 'scoped memory for tpu_custom_call.1']
  %s0 = inlined_call_operand.<no memory space> [shape: f32[1], index: 0, kind: input, shape index: {}]
  %s1 = inlined_call_operand.<no memory space> [shape: f32[1], index: 1, kind: input, shape index: {}]
  %s2 = inlined_call_operand.vmem [shape: f32[1,128], index: 2, kind: input, shape index: {}]
  %s3 = inlined_call_operand.vmem [shape: f32[128,16], index: 3, kind: input, shape index: {}]
  %s4 = inlined_call_operand.vmem [shape: f32[1,16], index: 4, kind: input, shape index: {}]
  %s5 = inlined_call_operand.hbm [shape: f32[1,16], index: 5, kind: output, shape index: {}]
  %s6 = sld [smem:[#allocation0]]
  $region30: #{tpu_custom_call.1} parent=0
    _
  %s8 = ssub.s32 1, %s6
  %s9 = scalar_select 0, %s8, %s6
  %10 = sst [smem:[#allocation2]] %s0
  %11 = sst [smem:[#allocation3]] %s1
  $region1: #{tpu_custom_call.1} parent=0
    #allocation4 [shape = 'u8[512]{0}', space=vmem, size = 0x400, scoped, tag = 'output window, operand 0, single buffered']
    #allocation5 [shape = 's32[1]{0}', space=sflag, size = 0x4, scoped, tag = 'scoped memory for tpu_custom_call.1']
    %12 = vsyncpa [#allocation5], 0
    // Predicated region
    $region2: #{tpu_custom_call.1} parent=1 // pred_check
      _
    $region3: #{tpu_custom_call.1} parent=1 // pred_check_branch
      %14 = sbr.rel (0) target = $region5
    $region4: #{tpu_custom_call.1} parent=1 // pred_region
      _
    $region5: #{tpu_custom_call.1} parent=1 // pred_fallthru
      _
    // Predicated region
    $region6: #{tpu_custom_call.1} parent=1 // pred_check
      _
    $region7: #{tpu_custom_call.1} parent=1 // pred_check_branch
      %16 = sbr.rel (0) target = $region9
    $region8: #{tpu_custom_call.1} parent=1 // pred_region
      _
    $region9: #{tpu_custom_call.1} parent=1 // pred_fallthru
      _
    // Predicated region
    $region10: #{tpu_custom_call.1} parent=1 // pred_check
      _
    $region11: #{tpu_custom_call.1} parent=1 // pred_check_branch
      %18 = sbr.rel (0) target = $region13
    $region12: #{tpu_custom_call.1} parent=1 // pred_region
      _
    $region13: #{tpu_custom_call.1} parent=1 // pred_fallthru
      _
    // Predicated region
    $region14: #{tpu_custom_call.1} parent=1 // pred_check
      _
    $region15: #{tpu_custom_call.1} parent=1 // pred_check_branch
      %20 = sbr.rel (0) target = $region17
    $region16: #{tpu_custom_call.1} parent=1 // pred_region
      _
    $region17: #{tpu_custom_call.1} parent=1 // pred_fallthru
      _
    // Predicated region
    $region18: #{tpu_custom_call.1} parent=1 // pred_check
      _
    $region19: #{tpu_custom_call.1} parent=1 // pred_check_branch
      %22 = sbr.rel (0) target = $region21
    $region20: #{tpu_custom_call.1} parent=1 // pred_region
      _
    $region21: #{tpu_custom_call.1} parent=1 // pred_fallthru
      _
    %s23 = sld [smem:[#allocation2]]
    %s24 = sld [smem:[#allocation3]]
    %v25 = vld [vmem:[%s2] sm:$0x1]
    %v26 = vstv %s23
    %v27 = vmul.f32 %v25, %v26
    %v28 = vstv %s24
    %v29 = vadd.f32 %v27, %v28
    %v30 = vmax.f32 %v29, 0.0
    %v31 = vld [vmem:[%s3] sm:$0xff]
    %v32 = vld [vmem:[%s3 + $0x8] sm:$0xff]
    %v33 = vld [vmem:[%s3 + $0x10] sm:$0xff]
    %v34 = vld [vmem:[%s3 + $0x18] sm:$0xff]
    %v35 = vld [vmem:[%s3 + $0x20] sm:$0xff]
    %v36 = vld [vmem:[%s3 + $0x28] sm:$0xff]
    %v37 = vld [vmem:[%s3 + $0x30] sm:$0xff]
    %v38 = vld [vmem:[%s3 + $0x38] sm:$0xff]
    %v39 = vld [vmem:[%s3 + $0x40] sm:$0xff]
    %v40 = vld [vmem:[%s3 + $0x48] sm:$0xff]
    %v41 = vld [vmem:[%s3 + $0x50] sm:$0xff]
    %v42 = vld [vmem:[%s3 + $0x58] sm:$0xff]
    %v43 = vld [vmem:[%s3 + $0x60] sm:$0xff]
    %v44 = vld [vmem:[%s3 + $0x68] sm:$0xff]
    %v45 = vld [vmem:[%s3 + $0x70] sm:$0xff]
    %v46 = vld [vmem:[%s3 + $0x78] sm:$0xff]
    %v47 = vld [vmem:[%s4] sm:$0x1]
    %48 = vmatprep.subr.mxu0 0.0
    %49 = vmatpush1.msra.mxu0 %v31
    %50 = vmatprep.subr.mxu0 0.0
    %51 = vmatpush1.msra.mxu0 %v32
    %52 = vmatprep.subr.mxu0 0.0
    %53 = vmatpush1.msra.mxu0 %v33
    %54 = vmatprep.subr.mxu0 0.0
    %55 = vmatpush1.msra.mxu0 %v34
    %56 = vmatprep.subr.mxu0 0.0
    %57 = vmatpush1.msra.mxu0 %v35
    %58 = vmatprep.subr.mxu0 0.0
    %59 = vmatpush1.msra.mxu0 %v36
    %60 = vmatprep.subr.mxu0 0.0
    %61 = vmatpush1.msra.mxu0 %v37
    %62 = vmatprep.subr.mxu0 0.0
    %63 = vmatpush1.msra.mxu0 %v38
    %64 = vmatprep.subr.mxu0 0.0
    %65 = vmatpush1.msra.mxu0 %v39
    %66 = vmatprep.subr.mxu0 0.0
    %67 = vmatpush1.msra.mxu0 %v40
    %68 = vmatprep.subr.mxu0 0.0
    %69 = vmatpush1.msra.mxu0 %v41
    %70 = vmatprep.subr.mxu0 0.0
    %71 = vmatpush1.msra.mxu0 %v42
    %72 = vmatprep.subr.mxu0 0.0
    %73 = vmatpush1.msra.mxu0 %v43
    %74 = vmatprep.subr.mxu0 0.0
    %75 = vmatpush1.msra.mxu0 %v44
    %76 = vmatprep.subr.mxu0 0.0
    %77 = vmatpush1.msra.mxu0 %v45
    %78 = vmatprep.subr.mxu0 0.0
    %79 = vmatpush1.msra.mxu0 %v46
    %80 = vmatprep.subr.mxu0 0.0
    %81 = vmatpush1.msra.mxu0 0.0
    %82 = vmatprep.subr.mxu0 0.0
    %83 = vmatpush1.msra.mxu0 0.0
    %84 = vmatprep.subr.mxu0 0.0
    %85 = vmatpush1.msra.mxu0 0.0
    %86 = vmatprep.subr.mxu0 0.0
    %87 = vmatpush1.msra.mxu0 0.0
    %88 = vmatprep.subr.mxu0 0.0
    %89 = vmatpush1.msra.mxu0 0.0
    %90 = vmatprep.subr.mxu0 0.0
    %91 = vmatpush1.msra.mxu0 0.0
    %92 = vmatprep.subr.mxu0 0.0
    %93 = vmatpush1.msra.mxu0 0.0
    %94 = vmatprep.subr.mxu0 0.0
    %95 = vmatpush1.msra.mxu0 0.0
    %96 = vmatprep.subr.mxu0 0.0
    %97 = vmatpush1.msra.mxu0 0.0
    %98 = vmatprep.subr.mxu0 0.0
    %99 = vmatpush1.msra.mxu0 0.0
    %100 = vmatprep.subr.mxu0 0.0
    %101 = vmatpush1.msra.mxu0 0.0
    %102 = vmatprep.subr.mxu0 0.0
    %103 = vmatpush1.msra.mxu0 0.0
    %104 = vmatprep.subr.mxu0 0.0
    %105 = vmatpush1.msra.mxu0 0.0
    %106 = vmatprep.subr.mxu0 0.0
    %107 = vmatpush1.msra.mxu0 0.0
    %108 = vmatprep.subr.mxu0 0.0
    %109 = vmatpush1.msra.mxu0 0.0
    %110 = vmatprep.subr.mxu0 0.0
    %111 = vmatpush1.msra.mxu0 0.0
    %112 = vmatprep.mubr.f32.mxu0 0.0
    %113 = vmatmul.mubr.f32.gmra.mrb[0].mxu0 %v30
    %v114 = vpop.f32.mrb[0].mxu0
    %v115 = vadd.f32 %v47, %v114
    %v116 = vpop.f32.mrb[0].mxu0
    %117 = vdwg.mxu0
    %vm118 = vcmask 122880
    %119 = vst.msk [vmem:[#allocation4] sm:$0x1] %vm118, %v115
    // Predicated region
    $region22: #{tpu_custom_call.1} parent=1 // pred_check
      _
    $region23: #{tpu_custom_call.1} parent=1 // pred_check_branch
      %121 = sbr.rel (0) target = $region25
    $region24: #{tpu_custom_call.1} parent=1 // pred_region
      %s123 = ssub.s32 16, 16
      %124 = vsyncadd [#allocation5], %s123
      %s126 = sshll.u32 [#allocation4], 4
      %s127 = int_to_ptr.vmem [resolvable:$true] %s126
      %129 = dma.vmem_to_hbm [thread:$0]  %s127, 16, %s5, [#allocation5]
    $region25: #{tpu_custom_call.1} parent=1 // pred_fallthru
      _
    // Predicated region
    $region26: #{tpu_custom_call.1} parent=1 // pred_check
      _
    $region27: #{tpu_custom_call.1} parent=1 // pred_check_branch
      %131 = sbr.rel (0) target = $region29
    $region28: #{tpu_custom_call.1} parent=1 // pred_region
      %132 = dma.done [#allocation5], 16
    $region29: #{tpu_custom_call.1} parent=1 // pred_fallthru
      _
    %133 = vsyncpa [#allocation5], 1

</llo_original>
